<compile_context>
chip_gen: v6e
topology: v6e:2x2x1
jax: 0.10.0
libtpu: 0.0.40
codegen_flags: <defaults>
</compile_context>

<pallas_src>
import functools

import jax
import jax.numpy as jnp
from jax.experimental import pallas as pl
from jax.experimental.pallas import tpu as pltpu

EPS = 1e-5


def _vmem_budget_bytes():
    """Generation-aware VMEM budget (~48 MiB on v7x, 64 MiB on v5e/v6e)."""
    cap = 64 << 20  # conservative default: v7x per-core VMEM
    try:
        cap = int(pltpu.get_tpu_info().vmem_capacity_bytes)
    except Exception:
        pass
    return max(16 << 20, min((cap * 3) // 4, 64 << 20))


def _sublane_align(itemsize):
    # f32 vregs pack (8,128), bf16 (16,128), int8/fp8 (32,128).
    return {4: 8, 2: 16, 1: 32}.get(itemsize, 8)


def _aligned_divisors(n, align):
    return [d for d in range(align, n + 1, align) if n % d == 0]


# --------------------------- fused resident-slab path -----------------------

def _fused_kernel(x_ref, w_ref, b_ref, o_ref, *, inv_count, eps):
    # x_ref/o_ref: (N, c_t, HW); w_ref/b_ref: (c_t, 1)
    x = x_ref[...].astype(jnp.float32)                                   # (N, c_t, HW)
    # batch-dim reduce first (VPU adds across vregs), one lane (XLU) reduce after
    s = jnp.sum(x, axis=0)                                               # (c_t, HW)
    mean = (jnp.sum(s, axis=1, keepdims=True) * inv_count)[None, :, :]   # (1, c_t, 1)
    d = x - mean
    v = jnp.sum(d * d, axis=0)                                           # (c_t, HW)
    var = (jnp.sum(v, axis=1, keepdims=True) * inv_count)[None, :, :]    # (1, c_t, 1)
    scale = w_ref[...][None, :, :] * jax.lax.rsqrt(var + eps)            # (1, c_t, 1)
    shift = b_ref[...][None, :, :]                                       # (1, c_t, 1)
    o_ref[...] = (d * scale + shift).astype(o_ref.dtype)


# --------------------------- two-phase streaming fallback --------------------

def _stats_kernel(x_ref, w_ref, b_ref, ss_ref, sum_ref, sq_ref, *,
                  inv_count, eps, hw_total, hw_tile, ragged_hw):
    # x_ref: (n_t, c_t, hw_t); w_ref/b_ref: (c_t, 1); ss_ref: (c_t, 2)
    # sum_ref/sq_ref: (c_t, hw_t) lane-wise partial accumulators.
    ni = pl.program_id(1)
    hi = pl.program_id(2)

    @pl.when((ni == 0) & (hi == 0))
    def _():
        sum_ref[...] = jnp.zeros_like(sum_ref)
        sq_ref[...] = jnp.zeros_like(sq_ref)

    x = x_ref[...].astype(jnp.float32)                          # (n_t, c_t, hw_t)
    if ragged_hw:
        lane = jax.lax.broadcasted_iota(jnp.int32, (1, 1, hw_tile), 2)
        x = jnp.where(lane + hi * hw_tile < hw_total, x, 0.0)   # mask OOB lanes
    # lane-wise partial accumulation (pure VPU); cross-lane reduce deferred
    sum_ref[...] += jnp.sum(x, axis=0)                          # (c_t, hw_t)
    sq_ref[...] += jnp.sum(x * x, axis=0)                       # (c_t, hw_t)

    @pl.when((ni == pl.num_programs(1) - 1) & (hi == pl.num_programs(2) - 1))
    def _():
        # single deferred cross-lane (XLU) reduction per channel block
        s = jnp.sum(sum_ref[...], axis=1, keepdims=True)        # (c_t, 1)
        q = jnp.sum(sq_ref[...], axis=1, keepdims=True)         # (c_t, 1)
        mean = s * inv_count
        var = jnp.maximum(q * inv_count - mean * mean, 0.0)
        scale = w_ref[...] * jax.lax.rsqrt(var + eps)
        shift = b_ref[...] - mean * scale
        ss_ref[:, 0:1] = scale
        ss_ref[:, 1:2] = shift


def _apply_kernel(x_ref, ss_ref, o_ref):
    # x_ref/o_ref: (n_t, c_t, hw_t); ss_ref: (c_t, 2)
    x = x_ref[...].astype(jnp.float32)
    scale = ss_ref[:, 0:1][None, :, :]                          # (1, c_t, 1)
    shift = ss_ref[:, 1:2][None, :, :]                          # (1, c_t, 1)
    o_ref[...] = (x * scale + shift).astype(o_ref.dtype)


# --------------------------------- wrapper -----------------------------------

def cross_bn2d(x_nchw, weight, bias, *, force_two_phase=False, max_tile_elems=None):
    """Training-mode BatchNorm2d forward with externally supplied weight/bias.

    x_nchw: (N, C, H, W); weight, bias: (C,). Returns NCHW output.
    force_two_phase / max_tile_elems are testing / tuning knobs only.
    """
    N, C, H, W = x_nchw.shape
    HW = H * W

    # Pure reshapes / tiny casts only -- no transposes, no full-tensor passes.
    x3 = x_nchw.reshape(N, C, HW)
    w2 = weight.reshape(C, 1).astype(jnp.float32)
    b2 = bias.reshape(C, 1).astype(jnp.float32)

    itemsize = jnp.dtype(x_nchw.dtype).itemsize
    c_align = _sublane_align(itemsize)
    budget = _vmem_budget_bytes()
    inv_count = 1.0 / float(N * HW)

    # Legal channel tiles: dtype-aligned divisors of C, or full C (always legal).
    c_cands = _aligned_divisors(C, c_align) or [C]

    # ---------------- Path A: fused resident-slab (1 read + 1 write of x) ----
    # Per-element VMEM cost of one (N, c_tile, HW) slab step:
    #   2x input + 2x output double-buffers + ~3 f32 compute temps.
    fused_bpe = 4 * itemsize + 12
    slab_cap = max(0, budget - (4 << 20)) // fused_bpe
    if max_tile_elems is not None:
        slab_cap = min(slab_cap, int(max_tile_elems))
    fit_c = [d for d in c_cands if d * N * HW <= slab_cap]
    if fit_c and not force_two_phase:
        # Prefer >=2 channel blocks: keeps both v7x TensorCores busy and gives
        # the auto-pipeline something to double-buffer.
        pref = [d for d in fit_c if C // d >= 2] or fit_c
        c_tile = max(pref)
        out3 = pl.pallas_call(
            functools.partial(_fused_kernel, inv_count=inv_count, eps=EPS),
            out_shape=jax.ShapeDtypeStruct((N, C, HW), x_nchw.dtype),
            grid=(C // c_tile,),
            in_specs=[
                pl.BlockSpec((N, c_tile, HW), lambda ci: (0, ci, 0)),
                pl.BlockSpec((c_tile, 1), lambda ci: (ci, 0)),
                pl.BlockSpec((c_tile, 1), lambda ci: (ci, 0)),
            ],
            out_specs=pl.BlockSpec((N, c_tile, HW), lambda ci: (0, ci, 0)),
            compiler_params=pltpu.CompilerParams(
                dimension_semantics=("parallel",),
                vmem_limit_bytes=budget,
            ),
        )(x3, w2, b2)
        return out3.reshape(N, C, H, W)

    # ---------------- Path B: two-phase streaming fallback -------------------
    # Per-element VMEM cost bound covering both phases (double-buffered in+out,
    # f32 temps, lane-partial scratch).
    fb_bpe = 4 * itemsize + 16
    tile_cap = max(8 * 128, (budget - (4 << 20)) // fb_bpe)
    if max_tile_elems is not None:
        tile_cap = min(tile_cap, int(max_tile_elems))

    # Channel tile: dtype-aligned, prefer >=2 channel blocks (v7x megacore),
    # leave room for a lane-dense HW tile.
    c_pool = [d for d in c_cands if C // d >= 2] or c_cands
    c_cap = max(c_align, tile_cap // 512)
    c_tile = max([d for d in c_pool if d <= c_cap], default=min(c_pool))

    # HW tile: lane axis, multiple of 128 (or the full -- possibly ragged -- HW).
    hw_cap = max(128, (tile_cap // c_tile) // 128 * 128)
    if HW % 128 == 0:
        units = HW // 128
        u = min(units, hw_cap // 128)
        while units % u:
            u -= 1
        hw_tile = u * 128
    else:
        hw_tile = min(((HW + 127) // 128) * 128, hw_cap)
        if hw_tile >= HW:
            hw_tile = HW            # full-dim block: always legal, no masking
    grid_hw = pl.cdiv(HW, hw_tile)
    ragged_hw = (HW % hw_tile) != 0

    # Batch tile: divisor of N filling the remaining budget.
    n_tile = max(1, min(N, tile_cap // (c_tile * hw_tile)))
    while N % n_tile:
        n_tile -= 1

    grid = (C // c_tile, N // n_tile, grid_hw)
    x_spec = pl.BlockSpec((n_tile, c_tile, hw_tile), lambda ci, ni, hi: (ni, ci, hi))
    col_spec = pl.BlockSpec((c_tile, 1), lambda ci, ni, hi: (ci, 0))
    ss_spec = pl.BlockSpec((c_tile, 2), lambda ci, ni, hi: (ci, 0))

    # Phase 1: per-channel scale/shift from one-pass batch statistics.
    scale_shift = pl.pallas_call(
        functools.partial(_stats_kernel, inv_count=inv_count, eps=EPS,
                          hw_total=HW, hw_tile=hw_tile, ragged_hw=ragged_hw),
        out_shape=jax.ShapeDtypeStruct((C, 2), jnp.float32),
        grid=grid,
        in_specs=[x_spec, col_spec, col_spec],
        out_specs=ss_spec,
        scratch_shapes=[
            pltpu.VMEM((c_tile, hw_tile), jnp.float32),   # lane-partial sum
            pltpu.VMEM((c_tile, hw_tile), jnp.float32),   # lane-partial sum(x^2)
        ],
        compiler_params=pltpu.CompilerParams(
            dimension_semantics=("parallel", "arbitrary", "arbitrary"),
            vmem_limit_bytes=budget,
        ),
    )(x3, w2, b2)

    # Phase 2: y = x * scale + shift (lane-dense tiles, fully parallel grid).
    out3 = pl.pallas_call(
        _apply_kernel,
        out_shape=jax.ShapeDtypeStruct((N, C, HW), x_nchw.dtype),
        grid=grid,
        in_specs=[x_spec, ss_spec],
        out_specs=x_spec,
        compiler_params=pltpu.CompilerParams(
            dimension_semantics=("parallel", "parallel", "parallel"),
            vmem_limit_bytes=budget,
        ),
    )(x3, scale_shift)

    return out3.reshape(N, C, H, W)


if __name__ == "__main__":
    key = jax.random.PRNGKey(0)
    kx, kw, kb = jax.random.split(key, 3)

    def ref_bn(x, w, b):
        mean = jnp.mean(x, axis=(0, 2, 3), keepdims=True)
        var = jnp.mean((x - mean) ** 2, axis=(0, 2, 3), keepdims=True)
        return ((x - mean) / jnp.sqrt(var + EPS) * w.reshape(1, -1, 1, 1)
                + b.reshape(1, -1, 1, 1))

    N, C, H, W = 2, 4, 16, 16
    x = jax.random.normal(kx, (N, C, H, W), dtype=jnp.float32)
    weight = jax.random.normal(kw, (C,), dtype=jnp.float32)
    bias = jax.random.normal(kb, (C,), dtype=jnp.float32)

    # 1) fused resident-slab path (default dispatch at this size)
    out = cross_bn2d(x, weight, bias)
    jax.block_until_ready(out)
    assert jnp.max(jnp.abs(out - ref_bn(x, weight, bias))) < 1e-4

    # 2) two-phase streaming fallback (forced), 128-multiple HW
    out2 = cross_bn2d(x, weight, bias, force_two_phase=True)
    jax.block_until_ready(out2)
    assert jnp.max(jnp.abs(out2 - ref_bn(x, weight, bias))) < 1e-4

    # 3) two-phase fallback with tiny tiles -> exercises ragged (non-128) HW
    #    cdiv grid + in-kernel lane masking
    x3 = jax.random.normal(kx, (2, 8, 12, 20), dtype=jnp.float32)   # HW = 240
    w3 = jax.random.normal(kw, (8,), dtype=jnp.float32)
    b3 = jax.random.normal(kb, (8,), dtype=jnp.float32)
    out3 = cross_bn2d(x3, w3, b3, force_two_phase=True, max_tile_elems=1024)
    jax.block_until_ready(out3)
    assert jnp.max(jnp.abs(out3 - ref_bn(x3, w3, b3))) < 1e-4

    print("KERNEL_OK")
</pallas_src>

<mosaic_0001>
module attributes {stable_mosaic.version = 11 : i64} {
  func.func @_fused_kernel(%arg0: i32, %arg1: memref<2x4x256xf32, #tpu.memory_space<vmem>>, %arg2: memref<4x1xf32, #tpu.memory_space<vmem>>, %arg3: memref<4x1xf32, #tpu.memory_space<vmem>>, %arg4: memref<2x4x256xf32, #tpu.memory_space<vmem>>) attributes {dimension_semantics = [#tpu.dimension_semantics<parallel>], iteration_bounds = array<i64: 1>, scalar_prefetch = 0 : i64, scratch_operands = 0 : i64, tpu.core_type = #tpu.core_type<tc>, window_params = [{transform_indices = @transform_0, window_bounds = array<i64: 2, 4, 256>}, {transform_indices = @transform_1, window_bounds = array<i64: 4, 1>}, {transform_indices = @transform_2, window_bounds = array<i64: 4, 1>}, {transform_indices = @transform_3, window_bounds = array<i64: 2, 4, 256>}]} {
    %c0 = arith.constant 0 : index
    %c0_0 = arith.constant 0 : index
    %c0_1 = arith.constant 0 : index
    %0 = vector.load %arg1[%c0, %c0_0, %c0_1] : memref<2x4x256xf32, #tpu.memory_space<vmem>>, vector<2x4x256xf32>
    %cst = arith.constant dense<0.000000e+00> : vector<4x256xf32>
    %1 = vector.multi_reduction <add>, %0, %cst [0] : vector<2x4x256xf32> to vector<4x256xf32>
    %cst_2 = arith.constant dense<0.000000e+00> : vector<4xf32>
    %2 = vector.multi_reduction <add>, %1, %cst_2 [1] : vector<4x256xf32> to vector<4xf32>
    %3 = vector.shape_cast %2 : vector<4xf32> to vector<4x1xf32>
    %cst_3 = arith.constant 0.001953125 : f32
    %4 = vector.broadcast %cst_3 : f32 to vector<4x1xf32>
    %5 = arith.mulf %3, %4 : vector<4x1xf32>
    %6 = vector.shape_cast %5 : vector<4x1xf32> to vector<1x4x1xf32>
    %7 = vector.broadcast %6 : vector<1x4x1xf32> to vector<2x4x256xf32>
    %8 = arith.subf %0, %7 : vector<2x4x256xf32>
    %9 = arith.mulf %8, %8 : vector<2x4x256xf32>
    %cst_4 = arith.constant dense<0.000000e+00> : vector<4x256xf32>
    %10 = vector.multi_reduction <add>, %9, %cst_4 [0] : vector<2x4x256xf32> to vector<4x256xf32>
    %cst_5 = arith.constant dense<0.000000e+00> : vector<4xf32>
    %11 = vector.multi_reduction <add>, %10, %cst_5 [1] : vector<4x256xf32> to vector<4xf32>
    %12 = vector.shape_cast %11 : vector<4xf32> to vector<4x1xf32>
    %cst_6 = arith.constant 0.001953125 : f32
    %13 = vector.broadcast %cst_6 : f32 to vector<4x1xf32>
    %14 = arith.mulf %12, %13 : vector<4x1xf32>
    %15 = vector.shape_cast %14 : vector<4x1xf32> to vector<1x4x1xf32>
    %c0_7 = arith.constant 0 : index
    %c0_8 = arith.constant 0 : index
    %16 = vector.load %arg2[%c0_7, %c0_8] : memref<4x1xf32, #tpu.memory_space<vmem>>, vector<4x1xf32>
    %17 = vector.shape_cast %16 : vector<4x1xf32> to vector<1x4x1xf32>
    %cst_9 = arith.constant 9.99999974E-6 : f32
    %18 = vector.broadcast %cst_9 : f32 to vector<1x4x1xf32>
    %19 = arith.addf %15, %18 : vector<1x4x1xf32>
    %20 = math.rsqrt %19 : vector<1x4x1xf32>
    %21 = arith.mulf %17, %20 : vector<1x4x1xf32>
    %c0_10 = arith.constant 0 : index
    %c0_11 = arith.constant 0 : index
    %22 = vector.load %arg3[%c0_10, %c0_11] : memref<4x1xf32, #tpu.memory_space<vmem>>, vector<4x1xf32>
    %23 = vector.shape_cast %22 : vector<4x1xf32> to vector<1x4x1xf32>
    %24 = vector.broadcast %21 : vector<1x4x1xf32> to vector<2x4x256xf32>
    %25 = arith.mulf %8, %24 : vector<2x4x256xf32>
    %26 = vector.broadcast %23 : vector<1x4x1xf32> to vector<2x4x256xf32>
    %27 = arith.addf %25, %26 : vector<2x4x256xf32>
    %c0_12 = arith.constant 0 : index
    %c0_13 = arith.constant 0 : index
    %c0_14 = arith.constant 0 : index
    %28 = vector.load %arg4[%c0_12, %c0_13, %c0_14] : memref<2x4x256xf32, #tpu.memory_space<vmem>>, vector<2x4x256xf32>
    tpu.vector_store %arg4[%c0_12, %c0_13, %c0_14], %27 {strides = array<i32>} : memref<2x4x256xf32, #tpu.memory_space<vmem>>, vector<2x4x256xf32>,
    return
  }
  func.func @transform_0(%arg0: i32) -> (i32, i32, i32) {
    %c0_i32 = arith.constant 0 : i32
    %c0_i32_0 = arith.constant 0 : i32
    %c0_i32_1 = arith.constant 0 : i32
    return %c0_i32, %arg0, %c0_i32_0 : i32, i32, i32
  }
  func.func @transform_1(%arg0: i32) -> (i32, i32) {
    %c0_i32 = arith.constant 0 : i32
    %c0_i32_0 = arith.constant 0 : i32
    return %arg0, %c0_i32 : i32, i32
  }
  func.func @transform_2(%arg0: i32) -> (i32, i32) {
    %c0_i32 = arith.constant 0 : i32
    %c0_i32_0 = arith.constant 0 : i32
    return %arg0, %c0_i32 : i32, i32
  }
  func.func @transform_3(%arg0: i32) -> (i32, i32, i32) {
    %c0_i32 = arith.constant 0 : i32
    %c0_i32_0 = arith.constant 0 : i32
    %c0_i32_1 = arith.constant 0 : i32
    return %c0_i32, %arg0, %c0_i32_0 : i32, i32, i32
  }
}

</mosaic_0001>

<llo_original>
// kernel: tpu_custom_call.1
$region0: #{tpu_custom_call.1}
  #allocation0 [shape = 'u32[]', space=smem, size = 0x4, offset = 0x4, fixed_abs, tag = 'smem constant byte address 0x4 - core index']
  #allocation1 [shape = 'u32[144,128]{1,0:T(1,128)}', space=vmem, size = 0x12000, scoped, tag = 'internal scratch']
  %s0 = inlined_call_operand.hbm [shape: f32[2,4,256], index: 0, kind: input, shape index: {}]
  %s1 = inlined_call_operand.vmem [shape: f32[4,1], index: 1, kind: input, shape index: {}]
  %s2 = inlined_call_operand.vmem [shape: f32[4,1], index: 2, kind: input, shape index: {}]
  %s3 = inlined_call_operand.hbm [shape: f32[2,4,256], index: 3, kind: output, shape index: {}]
  %s4 = sld [smem:[#allocation0]]
  $region26: #{tpu_custom_call.1} parent=0
    _
  %s6 = ssub.s32 1, %s4
  %s7 = scalar_select 0, %s6, %s4
  $region1: #{tpu_custom_call.1} parent=0
    #allocation2 [shape = 'u8[8192]{0}', space=vmem, size = 0x2000, scoped, tag = 'input window, operand 0, single buffered']
    #allocation3 [shape = 's32[1]{0}', space=sflag, size = 0x4, scoped, tag = 'scoped memory for tpu_custom_call.1']
    #allocation4 [shape = 's32[1]{0}', space=sflag, size = 0x4, scoped, tag = 'scoped memory for tpu_custom_call.1']
    #allocation5 [shape = 'u8[8192]{0}', space=vmem, size = 0x2000, scoped, tag = 'output window, operand 0, single buffered']
    %8 = vsyncpa [#allocation3], 0
    %9 = vsyncpa [#allocation4], 0
    // Predicated region
    $region2: #{tpu_custom_call.1} parent=1 // pred_check
      _
    $region3: #{tpu_custom_call.1} parent=1 // pred_check_branch
      %11 = sbr.rel (0) target = $region5
    $region4: #{tpu_custom_call.1} parent=1 // pred_region
      %s13 = ssub.s32 256, 256
      %14 = vsyncadd [#allocation3], %s13
      %s15 = sshll.u32 [#allocation2], 4
      %s16 = int_to_ptr.vmem [resolvable:$true] %s15
      %21 = dma.hbm_to_vmem [thread:$0]  %s0, 256, %s16, [#allocation3], 128, 128, 8
    $region5: #{tpu_custom_call.1} parent=1 // pred_fallthru
      _
    // Predicated region
    $region6: #{tpu_custom_call.1} parent=1 // pred_check
      _
    $region7: #{tpu_custom_call.1} parent=1 // pred_check_branch
      %23 = sbr.rel (0) target = $region9
    $region8: #{tpu_custom_call.1} parent=1 // pred_region
      _
    $region9: #{tpu_custom_call.1} parent=1 // pred_fallthru
      _
    // Predicated region
    $region10: #{tpu_custom_call.1} parent=1 // pred_check
      _
    $region11: #{tpu_custom_call.1} parent=1 // pred_check_branch
      %25 = sbr.rel (0) target = $region13
    $region12: #{tpu_custom_call.1} parent=1 // pred_region
      _
    $region13: #{tpu_custom_call.1} parent=1 // pred_fallthru
      _
    // Predicated region
    $region14: #{tpu_custom_call.1} parent=1 // pred_check
      _
    $region15: #{tpu_custom_call.1} parent=1 // pred_check_branch
      %27 = sbr.rel (0) target = $region17
    $region16: #{tpu_custom_call.1} parent=1 // pred_region
      %28 = dma.done [#allocation3], 256
    $region17: #{tpu_custom_call.1} parent=1 // pred_fallthru
      _
    %v29 = vld [vmem:[#allocation2] sm:$0xff]
    %v30 = vld [vmem:[#allocation2 + $0x8] sm:$0xff]
    %v33 = vcombine.high %v29, %v29
    %v34 = vcombine.high %v30, %v30
    %vm37 = vcmask 1043456
    %v38 = vsel %vm37, %v29, 0.0
    %v39 = vsel %vm37, %v30, 0.0
    %v40 = vadd.f32 %v38, %v39
    %v41 = vsel %vm37, %v33, 0.0
    %v42 = vsel %vm37, %v34, 0.0
    %v43 = vadd.f32 %v41, %v42
    %v44 = vsel %vm37, %v40, 0.0
    %v45 = vsel %vm37, %v43, 0.0
    %v46 = vadd.f32 %v44, %v45
    %47 = vadd.xlane.f32.xlu0 %v46
    %v48 = vpop.xlane.xlu0 %47
    %v49 = vmul.f32 %v48, 0.001953125
    %v52 = vunpack.c.l.s4 839922192
    %v53 = vunpack.c.0.s8 %v52
    %v54 = vlaneseq
    %v55 = vshrl.u32 %v54, 7
    %v56 = vsub.s32 %v53, %v55
    %v57 = vrot.slane %v49, %v56
    %v59 = vsub.f32 %v29, %v57
    %v60 = vsub.f32 %v30, %v57
    %v61 = vmul.f32 %v59, %v59
    %v62 = vmul.f32 %v60, %v60
    %v65 = vcombine.high %v61, %v61
    %v66 = vcombine.high %v62, %v62
    %v69 = vsel %vm37, %v61, 0.0
    %v70 = vsel %vm37, %v62, 0.0
    %v71 = vadd.f32 %v69, %v70
    %v72 = vsel %vm37, %v65, 0.0
    %v73 = vsel %vm37, %v66, 0.0
    %v74 = vadd.f32 %v72, %v73
    %v75 = vsel %vm37, %v71, 0.0
    %v76 = vsel %vm37, %v74, 0.0
    %v77 = vadd.f32 %v75, %v76
    %78 = vadd.xlane.f32.xlu0 %v77
    %v79 = vpop.xlane.xlu0 %78
    %v80 = vmul.f32 %v79, 0.001953125
    %v81 = vld [vmem:[%s1] sm:$0xf]
    %v82 = vadd.f32 %v80, 1e-05
    %v83 = vrsqrt.pop %v82
    %v84 = vmul.f32 %v81, %v83
    %v85 = vld [vmem:[%s2] sm:$0xf]
    %87 = vset.pattern.permute.xlu0 0
    %88 = vperm.xlu0 %87, %v84
    %v89 = vpop.permute.xlu0 %88
    %v91 = vunpack.c.l.s4 839922192
    %v92 = vunpack.c.0.s8 %v91
    %v93 = vlaneseq
    %v94 = vshrl.u32 %v93, 7
    %v95 = vsub.s32 %v92, %v94
    %v96 = vrot.slane %v89, %v95
    %v98 = vmul.f32 %v59, %v96
    %v99 = vmul.f32 %v60, %v96
    %101 = vset.pattern.permute.xlu0 0
    %102 = vperm.xlu0 %101, %v85
    %v103 = vpop.permute.xlu0 %102
    %v105 = vunpack.c.l.s4 839922192
    %v106 = vunpack.c.0.s8 %v105
    %v107 = vlaneseq
    %v108 = vshrl.u32 %v107, 7
    %v109 = vsub.s32 %v106, %v108
    %v110 = vrot.slane %v103, %v109
    %v112 = vadd.f32 %v98, %v110
    %v113 = vadd.f32 %v99, %v110
    %114 = vst [vmem:[#allocation5] sm:$0xff] %v112
    %115 = vst [vmem:[#allocation5 + $0x8] sm:$0xff] %v113
    // Predicated region
    $region18: #{tpu_custom_call.1} parent=1 // pred_check
      _
    $region19: #{tpu_custom_call.1} parent=1 // pred_check_branch
      %117 = sbr.rel (0) target = $region21
    $region20: #{tpu_custom_call.1} parent=1 // pred_region
      %s119 = ssub.s32 256, 256
      %120 = vsyncadd [#allocation4], %s119
      %s121 = sshll.u32 [#allocation5], 4
      %s122 = int_to_ptr.vmem [resolvable:$true] %s121
      %127 = dma.vmem_to_hbm [thread:$0]  %s122, 256, %s3, [#allocation4], 128, 128, 8
    $region21: #{tpu_custom_call.1} parent=1 // pred_fallthru
      _
    // Predicated region
    $region22: #{tpu_custom_call.1} parent=1 // pred_check
      _
    $region23: #{tpu_custom_call.1} parent=1 // pred_check_branch
      %129 = sbr.rel (0) target = $region25
    $region24: #{tpu_custom_call.1} parent=1 // pred_region
      %130 = dma.done [#allocation4], 256
    $region25: #{tpu_custom_call.1} parent=1 // pred_fallthru
      _
    %131 = vsyncpa [#allocation3], 1
    %132 = vsyncpa [#allocation4], 1

</llo_original>
